<compile_context>
chip_gen: v6e
topology: v6e:2x2x1
jax: 0.10.0
libtpu: 0.0.40
codegen_flags: <defaults>
</compile_context>

<pallas_src>
import functools

import jax
import jax.numpy as jnp
from jax.experimental import pallas as pl
from jax.experimental.pallas import tpu as pltpu

EPS = 1e-5
LANES = 128
SUBLANES = 8
TARGET_BLOCK_BYTES = 1 << 20   # ~1 MiB per block
CORE_SPLITS = 2                # pass-1 row-block sharding across TensorCores


def _round_up(x, m):
    return ((x + m - 1) // m) * m


def _bn_reduce_kernel(x_ref, sum_ref, sq_ref, *, rows, block_rows,
                      blocks_per_core):
    """Accumulate per-lane sum / sum-of-squares across row blocks."""
    c = pl.program_id(0)          # core-split index ("parallel")
    i = pl.program_id(1)          # row-block index within this core ("arbitrary")

    @pl.when(i == 0)
    def _():
        sum_ref[...] = jnp.zeros_like(sum_ref)
        sq_ref[...] = jnp.zeros_like(sq_ref)

    # Global (unclamped) row-block id.  Blocks past the end of the array are
    # fully masked out, so the clamped duplicate DMA in the index_map (and the
    # unspecified tail rows of the clipped edge block) contribute nothing.
    lin = c * blocks_per_core + i
    x = x_ref[...].astype(jnp.float32)                       # (block_rows, cols)
    row = jax.lax.broadcasted_iota(jnp.int32, x.shape, 0)
    x = jnp.where(lin * block_rows + row < rows, x, 0.0)

    sum_ref[0:1, :] += jnp.sum(x, axis=0, keepdims=True)     # (1, cols)
    sq_ref[0:1, :] += jnp.sum(x * x, axis=0, keepdims=True)  # (1, cols)


def _bn_apply_kernel(sb_ref, x_ref, o_ref):
    """o = x * scale + bias   (scale/bias read once from SMEM scalars)."""
    scale = sb_ref[0]
    bias = sb_ref[1]
    o_ref[...] = (x_ref[...].astype(jnp.float32) * scale + bias).astype(o_ref.dtype)


@jax.jit
def single_bn_forward(imgs, gamma, beta):
    """imgs: (N, C=1, L); gamma/beta: (C,).  Training-mode BatchNorm1d(1)."""
    n, c, l = imgs.shape
    assert c == 1  # module is nn.BatchNorm1d(1)
    # TODO(synk): C > 1 would need per-channel statistics (extra channel axis).

    m = n * c * l
    dtype = imgs.dtype

    # Free (metadata-only) 2D view of the contiguous input; lane-dense when
    # possible.  No jnp.pad, no extra HBM pass.
    if m % LANES == 0:
        rows, cols = m // LANES, LANES
    else:
        rows, cols = n, l
    x2d = imgs.reshape(rows, cols)

    # Block sizing: ~1 MiB per block (rows a multiple of 8 unless the block
    # covers the whole array).  VMEM footprint is sized on the lane-padded
    # width so small-L inputs don't oversubscribe VMEM.
    itemsize = jnp.dtype(dtype).itemsize
    padded_cols = _round_up(cols, LANES)
    block_rows = max(SUBLANES, TARGET_BLOCK_BYTES // (padded_cols * itemsize))
    block_rows = (block_rows // SUBLANES) * SUBLANES
    if block_rows >= rows:
        block_rows = rows
    num_blocks = (rows + block_rows - 1) // block_rows
    # TODO(synk): a single row larger than VMEM (cols*itemsize >> MiBs) would
    #             additionally need column tiling; not needed for this module.

    core_splits = min(CORE_SPLITS, num_blocks)
    blocks_per_core = (num_blocks + core_splits - 1) // core_splits

    def x_index(cc, ii):
        # Clamp overflow steps onto the last block; the in-kernel row mask
        # zeroes their contribution.
        return (jnp.minimum(cc * blocks_per_core + ii, num_blocks - 1), 0)

    # -------- Pass 1: streaming per-lane sum / sum-of-squares reduction -------
    reduce_kernel = functools.partial(
        _bn_reduce_kernel, rows=rows, block_rows=block_rows,
        blocks_per_core=blocks_per_core)
    lane_sum, lane_sq = pl.pallas_call(
        reduce_kernel,
        out_shape=(
            jax.ShapeDtypeStruct((core_splits * SUBLANES, cols), jnp.float32),
            jax.ShapeDtypeStruct((core_splits * SUBLANES, cols), jnp.float32),
        ),
        grid=(core_splits, blocks_per_core),
        in_specs=[pl.BlockSpec((block_rows, cols), x_index)],
        out_specs=(
            pl.BlockSpec((SUBLANES, cols), lambda cc, ii: (cc, 0)),
            pl.BlockSpec((SUBLANES, cols), lambda cc, ii: (cc, 0)),
        ),
        compiler_params=pltpu.CompilerParams(
            dimension_semantics=("parallel", "arbitrary")),
    )(x2d)

    # -------- Finalize: fold mean / var / gamma / beta into scale & bias ------
    count = jnp.float32(m)
    mean = jnp.sum(lane_sum) / count
    # Clamp: E[x^2] - mean^2 can go slightly negative from f32 cancellation.
    var = jnp.maximum(jnp.sum(lane_sq) / count - mean * mean, 0.0)
    inv_std = jax.lax.rsqrt(var + jnp.float32(EPS))
    g = gamma.astype(jnp.float32).reshape(-1)[0]
    b = beta.astype(jnp.float32).reshape(-1)[0]
    scale = g * inv_std
    bias = b - mean * scale
    scale_bias = jnp.stack([scale, bias])        # (2,) f32 -> SMEM scalars

    # -------- Pass 2: elementwise normalize, straight into the output ---------
    out2d = pl.pallas_call(
        _bn_apply_kernel,
        out_shape=jax.ShapeDtypeStruct((rows, cols), dtype),
        grid=(num_blocks,),
        in_specs=[
            pl.BlockSpec(memory_space=pltpu.MemorySpace.SMEM),
            pl.BlockSpec((block_rows, cols), lambda i: (i, 0)),
        ],
        out_specs=pl.BlockSpec((block_rows, cols), lambda i: (i, 0)),
        compiler_params=pltpu.CompilerParams(
            dimension_semantics=("parallel",)),
    )(scale_bias, x2d)

    return out2d.reshape(n, c, l)


if __name__ == "__main__":
    key = jax.random.PRNGKey(0)
    # nn.BatchNorm1d(1): input layout (N, C=1, L).
    imgs = jax.random.normal(key, (2, 1, 16), dtype=jnp.float32)

    # Deterministic BatchNorm1d(1) parameters (PyTorch init: gamma=1, beta=0).
    gamma = jnp.ones((1,), dtype=jnp.float32)
    beta = jnp.zeros((1,), dtype=jnp.float32)

    out = single_bn_forward(imgs, gamma, beta)
    out = jax.block_until_ready(out)

    # Pure-JAX reference of training-mode BatchNorm1d.
    x = imgs.astype(jnp.float32)
    mean = jnp.mean(x, axis=(0, 2), keepdims=True)
    var = jnp.mean((x - mean) ** 2, axis=(0, 2), keepdims=True)
    ref = ((x - mean) * jax.lax.rsqrt(var + EPS) * gamma.reshape(1, -1, 1)
           + beta.reshape(1, -1, 1)).astype(imgs.dtype)

    assert out.shape == imgs.shape
    assert jnp.allclose(out, ref, atol=1e-5, rtol=1e-5)

    print("KERNEL_OK")
</pallas_src>

<mosaic_0001>
module attributes {stable_mosaic.version = 11 : i64} {
  func.func @_bn_apply_kernel(%arg0: i32, %arg1: memref<2xf32, #tpu.memory_space<smem>>, %arg2: memref<2x16xf32, #tpu.memory_space<vmem>>, %arg3: memref<2x16xf32, #tpu.memory_space<vmem>>) attributes {dimension_semantics = [#tpu.dimension_semantics<parallel>], iteration_bounds = array<i64: 1>, scalar_prefetch = 0 : i64, scratch_operands = 0 : i64, tpu.core_type = #tpu.core_type<tc>, window_params = [{transform_indices = @transform_0, window_bounds = array<i64: 2>}, {transform_indices = @transform_1, window_bounds = array<i64: 2, 16>}, {transform_indices = @transform_2, window_bounds = array<i64: 2, 16>}]} {
    %c0 = arith.constant 0 : index
    %0 = memref.load %arg1[%c0] : memref<2xf32, #tpu.memory_space<smem>>
    %c1 = arith.constant 1 : index
    %1 = memref.load %arg1[%c1] : memref<2xf32, #tpu.memory_space<smem>>
    %c0_0 = arith.constant 0 : index
    %c0_1 = arith.constant 0 : index
    %2 = vector.load %arg2[%c0_0, %c0_1] : memref<2x16xf32, #tpu.memory_space<vmem>>, vector<2x16xf32>
    %3 = vector.broadcast %0 : f32 to vector<2x16xf32>
    %4 = arith.mulf %2, %3 : vector<2x16xf32>
    %5 = vector.broadcast %1 : f32 to vector<2x16xf32>
    %6 = arith.addf %4, %5 : vector<2x16xf32>
    %c0_2 = arith.constant 0 : index
    %c0_3 = arith.constant 0 : index
    %7 = vector.load %arg3[%c0_2, %c0_3] : memref<2x16xf32, #tpu.memory_space<vmem>>, vector<2x16xf32>
    tpu.vector_store %arg3[%c0_2, %c0_3], %6 {strides = array<i32>} : memref<2x16xf32, #tpu.memory_space<vmem>>, vector<2x16xf32>,
    return
  }
  func.func @transform_0(%arg0: i32) -> i32 {
    %c0_i32 = arith.constant 0 : i32
    %c0_i32_0 = arith.constant 0 : i32
    return %c0_i32 : i32
  }
  func.func @transform_1(%arg0: i32) -> (i32, i32) {
    %c0_i32 = arith.constant 0 : i32
    %c0_i32_0 = arith.constant 0 : i32
    return %arg0, %c0_i32 : i32, i32
  }
  func.func @transform_2(%arg0: i32) -> (i32, i32) {
    %c0_i32 = arith.constant 0 : i32
    %c0_i32_0 = arith.constant 0 : i32
    return %arg0, %c0_i32 : i32, i32
  }
}

module attributes {stable_mosaic.version = 11 : i64} {
  func.func @_bn_reduce_kernel(%arg0: i32, %arg1: i32, %arg2: memref<2x16xf32, #tpu.memory_space<vmem>>, %arg3: memref<8x16xf32, #tpu.memory_space<vmem>>, %arg4: memref<8x16xf32, #tpu.memory_space<vmem>>) attributes {dimension_semantics = [#tpu.dimension_semantics<parallel>, #tpu.dimension_semantics<arbitrary>], iteration_bounds = array<i64: 1, 1>, scalar_prefetch = 0 : i64, scratch_operands = 0 : i64, tpu.core_type = #tpu.core_type<tc>, window_params = [{transform_indices = @transform_0, window_bounds = array<i64: 2, 16>}, {transform_indices = @transform_1, window_bounds = array<i64: 8, 16>}, {transform_indices = @transform_2, window_bounds = array<i64: 8, 16>}]} {
    %c0_i32 = arith.constant 0 : i32
    %0 = arith.cmpi eq, %arg1, %c0_i32 : i32
    %1 = arith.extui %0 : i1 to i32
    %c0_i32_0 = arith.constant 0 : i32
    %2 = arith.cmpi ne, %1, %c0_i32_0 : i32
    scf.if %2 {
      %cst_13 = arith.constant 0.000000e+00 : f32
      %25 = vector.broadcast %cst_13 : f32 to vector<8x16xf32>
      %c0_14 = arith.constant 0 : index
      %c0_15 = arith.constant 0 : index
      %26 = vector.load %arg3[%c0_14, %c0_15] : memref<8x16xf32, #tpu.memory_space<vmem>>, vector<8x16xf32>
      tpu.vector_store %arg3[%c0_14, %c0_15], %25 {strides = array<i32>} : memref<8x16xf32, #tpu.memory_space<vmem>>, vector<8x16xf32>,
      %cst_16 = arith.constant 0.000000e+00 : f32
      %27 = vector.broadcast %cst_16 : f32 to vector<8x16xf32>
      %c0_17 = arith.constant 0 : index
      %c0_18 = arith.constant 0 : index
      %28 = vector.load %arg4[%c0_17, %c0_18] : memref<8x16xf32, #tpu.memory_space<vmem>>, vector<8x16xf32>
      tpu.vector_store %arg4[%c0_17, %c0_18], %27 {strides = array<i32>} : memref<8x16xf32, #tpu.memory_space<vmem>>, vector<8x16xf32>,
    } else {
    }
    %c1_i32 = arith.constant 1 : i32
    %3 = arith.muli %arg0, %c1_i32 : i32
    %4 = arith.addi %3, %arg1 : i32
    %c0 = arith.constant 0 : index
    %c0_1 = arith.constant 0 : index
    %5 = vector.load %arg2[%c0, %c0_1] : memref<2x16xf32, #tpu.memory_space<vmem>>, vector<2x16xf32>
    %6 = tpu.iota {dimensions = array<i32: 0>} : vector<2x16xi32>
    %c2_i32 = arith.constant 2 : i32
    %7 = arith.muli %4, %c2_i32 : i32
    %8 = vector.broadcast %7 : i32 to vector<2x16xi32>
    %9 = arith.addi %8, %6 : vector<2x16xi32>
    %c2_i32_2 = arith.constant 2 : i32
    %10 = vector.broadcast %c2_i32_2 : i32 to vector<2x16xi32>
    %11 = arith.cmpi slt, %9, %10 : vector<2x16xi32>
    %cst = arith.constant 0.000000e+00 : f32
    %12 = vector.broadcast %cst : f32 to vector<2x16xf32>
    %13 = arith.select %11, %5, %12 : vector<2x16xi1>, vector<2x16xf32>
    %c0_3 = arith.constant 0 : index
    %c0_4 = arith.constant 0 : index
    %14 = vector.load %arg3[%c0_3, %c0_4] : memref<8x16xf32, #tpu.memory_space<vmem>>, vector<1x16xf32>
    %cst_5 = arith.constant dense<0.000000e+00> : vector<16xf32>
    %15 = vector.multi_reduction <add>, %13, %cst_5 [0] : vector<2x16xf32> to vector<16xf32>
    %16 = vector.shape_cast %15 : vector<16xf32> to vector<1x16xf32>
    %17 = arith.addf %14, %16 : vector<1x16xf32>
    %c0_6 = arith.constant 0 : index
    %c0_7 = arith.constant 0 : index
    %18 = vector.load %arg3[%c0_6, %c0_7] : memref<8x16xf32, #tpu.memory_space<vmem>>, vector<1x16xf32>
    tpu.vector_store %arg3[%c0_6, %c0_7], %17 {strides = array<i32>} : memref<8x16xf32, #tpu.memory_space<vmem>>, vector<1x16xf32>,
    %c0_8 = arith.constant 0 : index
    %c0_9 = arith.constant 0 : index
    %19 = vector.load %arg4[%c0_8, %c0_9] : memref<8x16xf32, #tpu.memory_space<vmem>>, vector<1x16xf32>
    %20 = arith.mulf %13, %13 : vector<2x16xf32>
    %cst_10 = arith.constant dense<0.000000e+00> : vector<16xf32>
    %21 = vector.multi_reduction <add>, %20, %cst_10 [0] : vector<2x16xf32> to vector<16xf32>
    %22 = vector.shape_cast %21 : vector<16xf32> to vector<1x16xf32>
    %23 = arith.addf %19, %22 : vector<1x16xf32>
    %c0_11 = arith.constant 0 : index
    %c0_12 = arith.constant 0 : index
    %24 = vector.load %arg4[%c0_11, %c0_12] : memref<8x16xf32, #tpu.memory_space<vmem>>, vector<1x16xf32>
    tpu.vector_store %arg4[%c0_11, %c0_12], %23 {strides = array<i32>} : memref<8x16xf32, #tpu.memory_space<vmem>>, vector<1x16xf32>,
    return
  }
  func.func @transform_0(%arg0: i32, %arg1: i32) -> (i32, i32) {
    %c1_i32 = arith.constant 1 : i32
    %0 = arith.muli %arg0, %c1_i32 : i32
    %1 = arith.addi %0, %arg1 : i32
    %c0_i32 = arith.constant 0 : i32
    %2 = arith.minsi %1, %c0_i32 : i32
    %c0_i32_0 = arith.constant 0 : i32
    %c0_i32_1 = arith.constant 0 : i32
    return %2, %c0_i32_0 : i32, i32
  }
  func.func @transform_1(%arg0: i32, %arg1: i32) -> (i32, i32) {
    %c0_i32 = arith.constant 0 : i32
    %c0_i32_0 = arith.constant 0 : i32
    return %arg0, %c0_i32 : i32, i32
  }
  func.func @transform_2(%arg0: i32, %arg1: i32) -> (i32, i32) {
    %c0_i32 = arith.constant 0 : i32
    %c0_i32_0 = arith.constant 0 : i32
    return %arg0, %c0_i32 : i32, i32
  }
}

</mosaic_0001>

<llo_original>
// kernel: single_bn_forward.3
$region0: #{single_bn_forward.3}
  #allocation0 [shape = 'u32[]', space=smem, size = 0x4, offset = 0x4, fixed_abs, tag = 'smem constant byte address 0x4 - core index']
  #allocation1 [shape = 'u32[144,128]{1,0:T(1,128)}', space=vmem, size = 0x12000, scoped, tag = 'internal scratch']
  %s0 = inlined_call_operand.vmem [shape: f32[2], index: 0, kind: input, shape index: {}]
  %s1 = inlined_call_operand.vmem [shape: f32[2,16], index: 1, kind: input, shape index: {}]
  %s2 = inlined_call_operand.hbm [shape: f32[2,16], index: 2, kind: output, shape index: {}]
  %s3 = sld [smem:[#allocation0]]
  $region22: #{single_bn_forward.3} parent=0
    _
  %s5 = ssub.s32 1, %s3
  %s6 = scalar_select 0, %s5, %s3
  $region1: #{single_bn_forward.3} parent=0
    #allocation2 [shape = 'u8[512]{0}', space=smem, size = 0x200, scoped, tag = 'input window, operand 0, single buffered']
    #allocation3 [shape = 's32[1]{0}', space=sflag, size = 0x4, scoped, tag = 'scoped memory for single_bn_forward.3']
    #allocation4 [shape = 's32[1]{0}', space=sflag, size = 0x4, scoped, tag = 'scoped memory for single_bn_forward.3']
    #allocation5 [shape = 'u8[1024]{0}', space=vmem, size = 0x400, scoped, tag = 'output window, operand 0, single buffered']
    %7 = vsyncpa [#allocation4], 0
    %8 = vsyncpa [#allocation3], 0
    // Predicated region
    $region2: #{single_bn_forward.3} parent=1 // pred_check
      _
    $region3: #{single_bn_forward.3} parent=1 // pred_check_branch
      %10 = sbr.rel (0) target = $region5
    $region4: #{single_bn_forward.3} parent=1 // pred_region
      %s12 = ssub.s32 16, 16
      %13 = vsyncadd [#allocation4], %s12
      %s15 = sshll.u32 %s0, 4
      %s16 = int_to_ptr.vmem [resolvable:$true] %s15
      %18 = dma.vmem_to_smem %s16, 16, [#allocation2], [#allocation4]
    $region5: #{single_bn_forward.3} parent=1 // pred_fallthru
      _
    // Predicated region
    $region6: #{single_bn_forward.3} parent=1 // pred_check
      _
    $region7: #{single_bn_forward.3} parent=1 // pred_check_branch
      %20 = sbr.rel (0) target = $region9
    $region8: #{single_bn_forward.3} parent=1 // pred_region
      _
    $region9: #{single_bn_forward.3} parent=1 // pred_fallthru
      _
    // Predicated region
    $region10: #{single_bn_forward.3} parent=1 // pred_check
      _
    $region11: #{single_bn_forward.3} parent=1 // pred_check_branch
      %22 = sbr.rel (0) target = $region13
    $region12: #{single_bn_forward.3} parent=1 // pred_region
      %23 = dma.done [#allocation4], 16
    $region13: #{single_bn_forward.3} parent=1 // pred_fallthru
      _
    %24 = sfence
    %s25 = sld [smem:[#allocation2]]
    %s26 = sld [smem:[#allocation2 + $0x1]]
    %v27 = vld [vmem:[%s1] sm:$0x3]
    %v28 = vstv %s25
    %v29 = vmul.f32 %v27, %v28
    %v30 = vstv %s26
    %v31 = vadd.f32 %v29, %v30
    %vm32 = vcmask 123904
    %33 = vst.msk [vmem:[#allocation5] sm:$0x3] %vm32, %v31
    // Predicated region
    $region14: #{single_bn_forward.3} parent=1 // pred_check
      _
    $region15: #{single_bn_forward.3} parent=1 // pred_check_branch
      %35 = sbr.rel (0) target = $region17
    $region16: #{single_bn_forward.3} parent=1 // pred_region
      %s37 = ssub.s32 32, 32
      %38 = vsyncadd [#allocation3], %s37
      %s40 = sshll.u32 [#allocation5], 4
      %s41 = int_to_ptr.vmem [resolvable:$true] %s40
      %43 = dma.vmem_to_hbm [thread:$0]  %s41, 32, %s2, [#allocation3]
    $region17: #{single_bn_forward.3} parent=1 // pred_fallthru
      _
    // Predicated region
    $region18: #{single_bn_forward.3} parent=1 // pred_check
      _
    $region19: #{single_bn_forward.3} parent=1 // pred_check_branch
      %45 = sbr.rel (0) target = $region21
    $region20: #{single_bn_forward.3} parent=1 // pred_region
      %46 = dma.done [#allocation3], 32
    $region21: #{single_bn_forward.3} parent=1 // pred_fallthru
      _
    %47 = vsyncpa [#allocation3], 1
    %48 = vsyncpa [#allocation4], 1

// kernel: single_bn_forward.2
$region0: #{single_bn_forward.2}
  #allocation0 [shape = 'u32[]', space=smem, size = 0x4, offset = 0x4, fixed_abs, tag = 'smem constant byte address 0x4 - core index']
  #allocation1 [shape = 'u32[144,128]{1,0:T(1,128)}', space=vmem, size = 0x12000, scoped, tag = 'internal scratch']
  %s0 = inlined_call_operand.hbm [shape: f32[2,16], index: 0, kind: input, shape index: {}]
  %s1 = inlined_call_operand.vmem [shape: f32[8,16], index: 1, kind: output, shape index: {0}]
  %s2 = inlined_call_operand.vmem [shape: f32[8,16], index: 2, kind: output, shape index: {1}]
  %3 = xla_tuple %s1, %s2
  %s4 = sld [smem:[#allocation0]]
  $region30: #{single_bn_forward.2} parent=0
    _
  %s6 = ssub.s32 1, %s4
  %s7 = scalar_select 0, %s6, %s4
  $region1: #{single_bn_forward.2} parent=0
    #allocation2 [shape = 'u8[1024]{0}', space=vmem, size = 0x400, scoped, tag = 'input window, operand 0, single buffered']
    #allocation3 [shape = 's32[1]{0}', space=sflag, size = 0x4, scoped, tag = 'scoped memory for single_bn_forward.2']
    %8 = vsyncpa [#allocation3], 0
    // Predicated region
    $region2: #{single_bn_forward.2} parent=1 // pred_check
      _
    $region3: #{single_bn_forward.2} parent=1 // pred_check_branch
      %10 = sbr.rel (0) target = $region5
    $region4: #{single_bn_forward.2} parent=1 // pred_region
      %s11 = sadd.s32 0, 0
      %p12 = scmp.lt.s32.totalorder %s11, 0
      %s13 = scalar_select %p12, %s11, 0
      %s15 = ssub.s32 32, 32
      %16 = vsyncadd [#allocation3], %s15
      %s17 = smul.addr %s13, 32
      %s18 = scalar_lea.hbm %s0, %s17
      %s20 = sshll.u32 [#allocation2], 4
      %s21 = int_to_ptr.vmem [resolvable:$true] %s20
      %23 = dma.hbm_to_vmem [thread:$0]  %s18, 32, %s21, [#allocation3]
    $region5: #{single_bn_forward.2} parent=1 // pred_fallthru
      _
    // Predicated region
    $region6: #{single_bn_forward.2} parent=1 // pred_check
      _
    $region7: #{single_bn_forward.2} parent=1 // pred_check_branch
      %25 = sbr.rel (0) target = $region9
    $region8: #{single_bn_forward.2} parent=1 // pred_region
      %26 = dma.done [#allocation3], 32
    $region9: #{single_bn_forward.2} parent=1 // pred_fallthru
      _
    %s27 = sadd.s32 0, 0
    %p28 = scmp.lt.s32.totalorder %s27, 0
    %s29 = scalar_select %p28, %s27, 0
    %p30 = scmp.eq.s32.totalorder 0, 0
    // Predicated region
    $region10: #{single_bn_forward.2} parent=1 // pred_check
      %p31 = pneg %p30
    $region11: #{single_bn_forward.2} parent=1 // pred_check_branch
      %33 = sbr.rel (%p31) target = $region13
    $region12: #{single_bn_forward.2} parent=1 // pred_region
      %vm34 = vcmask 130048
      %35 = vst.msk [vmem:[%s1] sm:$0xff] %vm34, 0.0
      %36 = vst.msk [vmem:[%s2] sm:$0xff] %vm34, 0.0
    $region13: #{single_bn_forward.2} parent=1 // pred_fallthru
      _
    %s37 = sadd.s32 0, 0
    %v38 = vld [vmem:[#allocation2] sm:$0x3]
    %v39 = vlaneseq
    %v40 = vshrl.u32 %v39, 7
    %s41 = smul.u32 %s37, 2
    %v42 = vstv %s41
    %v43 = vadd.s32 %v42, %v40
    %vm44 = vcmp.lt.s32.totalorder %v43, 2
    %v45 = vsel %vm44, %v38, 0.0
    %v46 = vld [vmem:[%s1] sm:$0x1]
    %vm47 = vcmask 123904
    %v48 = vsel %vm47, %v45, 0.0
    %v49 = vrot.slane %v48, 4
    %v50 = vadd.f32 %v48, %v49
    %v51 = vrot.slane %v50, 2
    %v52 = vadd.f32 %v50, %v51
    %v53 = vrot.slane %v52, 1
    %v54 = vadd.f32 %v52, %v53
    %v55 = vadd.f32 %v46, %v54
    %vm56 = vcmask 122880
    %57 = vst.msk [vmem:[%s1] sm:$0x1] %vm56, %v55
    %v58 = vld [vmem:[%s2] sm:$0x1]
    %v59 = vmul.f32 %v45, %v45
    %v60 = vsel %vm47, %v59, 0.0
    %v61 = vrot.slane %v60, 4
    %v62 = vadd.f32 %v60, %v61
    %v63 = vrot.slane %v62, 2
    %v64 = vadd.f32 %v62, %v63
    %v65 = vrot.slane %v64, 1
    %v66 = vadd.f32 %v64, %v65
    %v67 = vadd.f32 %v58, %v66
    %68 = vst.msk [vmem:[%s2] sm:$0x1] %vm56, %v67
    // Predicated region
    $region14: #{single_bn_forward.2} parent=1 // pred_check
      _
    $region15: #{single_bn_forward.2} parent=1 // pred_check_branch
      %70 = sbr.rel (0) target = $region17
    $region16: #{single_bn_forward.2} parent=1 // pred_region
      _
    $region17: #{single_bn_forward.2} parent=1 // pred_fallthru
      _
    // Predicated region
    $region18: #{single_bn_forward.2} parent=1 // pred_check
      _
    $region19: #{single_bn_forward.2} parent=1 // pred_check_branch
      %72 = sbr.rel (0) target = $region21
    $region20: #{single_bn_forward.2} parent=1 // pred_region
      _
    $region21: #{single_bn_forward.2} parent=1 // pred_fallthru
      _
    // Predicated region
    $region22: #{single_bn_forward.2} parent=1 // pred_check
      _
    $region23: #{single_bn_forward.2} parent=1 // pred_check_branch
      %74 = sbr.rel (0) target = $region25
    $region24: #{single_bn_forward.2} parent=1 // pred_region
      _
    $region25: #{single_bn_forward.2} parent=1 // pred_fallthru
      _
    // Predicated region
    $region26: #{single_bn_forward.2} parent=1 // pred_check
      _
    $region27: #{single_bn_forward.2} parent=1 // pred_check_branch
      %76 = sbr.rel (0) target = $region29
    $region28: #{single_bn_forward.2} parent=1 // pred_region
      _
    $region29: #{single_bn_forward.2} parent=1 // pred_fallthru
      _
    %77 = vsyncpa [#allocation3], 1

</llo_original>
